<compile_context>
chip_gen: v5e
topology: v5e:2x2
jax: 0.10.0
libtpu: 0.0.40
codegen_flags: <defaults>
</compile_context>

<pallas_src>
import functools
import math

import jax
import jax.numpy as jnp
from jax import lax
from jax.experimental import pallas as pl
from jax.experimental.pallas import tpu as pltpu

_MM_DTYPE = jnp.bfloat16            # MLP matmul dtype (set to jnp.float32 for exact f32 parity)
_VMEM_LIMIT_BYTES = 48 * 1024 * 1024
_LANE = 128


def _round_up(x, mult):
    return ((x + mult - 1) // mult) * mult


def _pad_last(x, target):
    pad = target - x.shape[-1]
    if pad == 0:
        return x
    widths = [(0, 0)] * (x.ndim - 1) + [(0, pad)]
    return jnp.pad(x, widths)


# ---------------------------------------------------------------------------
# Kernel 1: LabModule channel gate
#   per-batch max over the real points -> 1x1 conv -> ReLU -> [dropout] ->
#   1x1 conv -> sigmoid.  Accumulates the running max across n tiles in VMEM.
# ---------------------------------------------------------------------------
def _gate_kernel(uf_ref, w1_ref, w2_ref, out_ref, gmax_ref, *, n_valid, tile_n):
    t = pl.program_id(1)
    neg_big = jnp.float32(-1e30)

    @pl.when(t == 0)
    def _():
        gmax_ref[...] = jnp.full(gmax_ref.shape, neg_big, gmax_ref.dtype)

    x = uf_ref[0]                                                     # (C1, TN)
    gcol = t * tile_n + lax.broadcasted_iota(jnp.int32, x.shape, 1)   # global point index
    xm = jnp.where(gcol < n_valid, x, neg_big)                        # ignore zero-padded points
    gmax_ref[...] = jnp.maximum(gmax_ref[...], jnp.max(xm, axis=1, keepdims=True))

    @pl.when(t == pl.num_programs(1) - 1)
    def _():
        g = gmax_ref[...]                                             # (C1, 1)
        # SE bottleneck (tiny per-batch matvecs; negligible cost next to the fused head).
        h = jnp.maximum(jnp.dot(w1_ref[...], g, preferred_element_type=jnp.float32), 0.0)
        # TODO(synk): nn.Dropout is identity in eval mode; training-mode dropout not implemented.
        s = jnp.dot(w2_ref[...], h, preferred_element_type=jnp.float32)
        out_ref[0] = 1.0 / (1.0 + jnp.exp(-s))                        # sigmoid


def _gate_pallas(uf, w1, w2, *, n_valid, tile_n):
    B, C1, n_pad = uf.shape
    Cr = w1.shape[0]
    return pl.pallas_call(
        functools.partial(_gate_kernel, n_valid=n_valid, tile_n=tile_n),
        out_shape=jax.ShapeDtypeStruct((B, C1, 1), jnp.float32),
        grid=(B, n_pad // tile_n),
        in_specs=[
            pl.BlockSpec((1, C1, tile_n), lambda b, t: (b, 0, t)),
            pl.BlockSpec((Cr, C1), lambda b, t: (0, 0)),
            pl.BlockSpec((C1, Cr), lambda b, t: (0, 0)),
        ],
        out_specs=pl.BlockSpec((1, C1, 1), lambda b, t: (b, 0, 0)),
        scratch_shapes=[pltpu.VMEM((C1, 1), jnp.float32)],
        compiler_params=pltpu.CompilerParams(
            dimension_semantics=("parallel", "arbitrary"),
            vmem_limit_bytes=_VMEM_LIMIT_BYTES),
    )(uf, w1, w2)


# ---------------------------------------------------------------------------
# Kernel 2: fused three_nn + three_interpolate + gating + concat + vd tiling + MLP head.
# Grid = (batch, n tiles).  known coords/feats are VMEM-resident along the tile axis.
# ---------------------------------------------------------------------------
def _fp_fused_kernel(*refs, num_layers, m_valid, tile_n, k_vd):
    (ux_ref, kx_ref, kf_ref, uf_ref, gate_ref, vd_ref,
     w_i_ref, w_g_ref, w_v_ref, s0_ref, b0_ref) = refs[:11]
    layer_refs = refs[11:11 + 3 * (num_layers - 1)]
    out_ref = refs[11 + 3 * (num_layers - 1)]

    f32 = jnp.float32
    u = ux_ref[0]                               # (3, TN)  channels-first coords
    k = kx_ref[0]                               # (3, M)
    kf = kf_ref[0]                              # (C2, M)
    tn = u.shape[1]
    m_pad = k.shape[1]

    # --- three_nn: squared distances via ||u||^2 + ||k||^2 - 2 u.k (cross term on the MXU)
    cross = lax.dot_general(u, k, (((0,), (0,)), ((), ())),
                            preferred_element_type=f32)               # (TN, M)
    usq = lax.dot_general(u * u, jnp.ones((3, 1), f32),
                          (((0,), (0,)), ((), ())),
                          preferred_element_type=f32)                 # (TN, 1) row norms (no relayout)
    ksq = jnp.sum(k * k, axis=0, keepdims=True)                       # (1, M)
    d = jnp.maximum(usq + ksq - 2.0 * cross, 0.0)                     # clamp cancellation noise

    big = f32(1e30)
    col = lax.broadcasted_iota(jnp.int32, (tn, m_pad), 1)
    if m_valid < m_pad:                                               # never select padded knowns
        d = jnp.where(col < m_valid, d, big)

    # --- top-3 selection with inverse-squared-distance weights (matches pointnet2 three_nn).
    # NOTE: degenerate m_valid < 3 silently yields near-zero extra weights (same as before).
    work = d
    acc_w = jnp.zeros((tn, m_pad), f32)   # sum_j 1/(d_j + eps) scattered at the 3 argmin columns
    for _ in range(3):
        minval = jnp.min(work, axis=1, keepdims=True)                 # (TN, 1)
        is_min = work <= minval
        idx = jnp.min(jnp.where(is_min, col, m_pad), axis=1, keepdims=True)
        sel = col == idx                                              # first occurrence only
        dr = 1.0 / (minval + 1e-8)
        acc_w = jnp.where(sel, acc_w + dr, acc_w)
        work = jnp.where(sel, big, work)

    # --- three_interpolate: gather on the MXU, normalize AFTER the matmul.
    interp = lax.dot_general(kf, acc_w, (((1,), (1,)), ((), ())),
                             preferred_element_type=f32)              # (C2, TN)
    dr_sum = lax.dot_general(jnp.ones((1, m_pad), f32), acc_w,
                             (((1,), (1,)), ((), ())),
                             preferred_element_type=f32)              # (1, TN), lane-dense layout
    interp = interp / dr_sum

    # --- LabModule gating of the skip features (per-batch gate precomputed by kernel 1).
    gated = gate_ref[0] * uf_ref[0]                                   # (C1, TN)

    # --- fused concat + first MLP layer: W1 = [W_interp | W_gated | W_vd]
    w_i = w_i_ref[...]
    w_g = w_g_ref[...]
    w_v = w_v_ref[...]
    mm = w_i.dtype
    vd_contrib = jnp.dot(w_v, vd_ref[0].astype(mm),
                         preferred_element_type=f32)                  # (C_out0, k_vd)
    vd_tiled = jnp.tile(vd_contrib, (1, tile_n // k_vd))              # (C_out0, TN)
    x = (jnp.dot(w_i, interp.astype(mm), preferred_element_type=f32)
         + jnp.dot(w_g, gated.astype(mm), preferred_element_type=f32)
         + vd_tiled)
    x = jnp.maximum(x * s0_ref[...] + b0_ref[...], 0.0)               # folded BN + ReLU

    # --- remaining MLP layers
    for l in range(num_layers - 1):
        w = layer_refs[3 * l][...]
        sc = layer_refs[3 * l + 1][...]
        bi = layer_refs[3 * l + 2][...]
        x = jnp.dot(w, x.astype(w.dtype), preferred_element_type=f32)
        x = jnp.maximum(x * sc + bi, 0.0)

    out_ref[0] = x


def _fp_fused_pallas(ux, kx, kf, uf, gate, vd, params, *, m_valid, tile_n, k_vd):
    B, _, n_pad = ux.shape
    m_pad = kx.shape[2]
    C2 = kf.shape[1]
    C1 = uf.shape[1]
    Cv = vd.shape[1]

    w_i, w_g, w_v, s0, b0 = params["mlp0"]
    rest = params["mlp_rest"]
    num_layers = 1 + len(rest)
    c_last = rest[-1][0].shape[0] if rest else w_i.shape[0]

    in_specs = [
        pl.BlockSpec((1, 3, tile_n), lambda b, t: (b, 0, t)),      # unknown coords tile
        pl.BlockSpec((1, 3, m_pad), lambda b, t: (b, 0, 0)),       # known coords (resident)
        pl.BlockSpec((1, C2, m_pad), lambda b, t: (b, 0, 0)),      # known feats (resident)
        pl.BlockSpec((1, C1, tile_n), lambda b, t: (b, 0, t)),     # skip feats tile
        pl.BlockSpec((1, C1, 1), lambda b, t: (b, 0, 0)),          # channel gate
        pl.BlockSpec((1, Cv, k_vd), lambda b, t: (b, 0, 0)),       # vd features (untiled)
        pl.BlockSpec(w_i.shape, lambda b, t: (0, 0)),
        pl.BlockSpec(w_g.shape, lambda b, t: (0, 0)),
        pl.BlockSpec(w_v.shape, lambda b, t: (0, 0)),
        pl.BlockSpec(s0.shape, lambda b, t: (0, 0)),
        pl.BlockSpec(b0.shape, lambda b, t: (0, 0)),
    ]
    flat = [ux, kx, kf, uf, gate, vd, w_i, w_g, w_v, s0, b0]
    for (w, sc, bi) in rest:
        in_specs += [pl.BlockSpec(w.shape, lambda b, t: (0, 0)),
                     pl.BlockSpec(sc.shape, lambda b, t: (0, 0)),
                     pl.BlockSpec(bi.shape, lambda b, t: (0, 0))]
        flat += [w, sc, bi]

    return pl.pallas_call(
        functools.partial(_fp_fused_kernel, num_layers=num_layers, m_valid=m_valid,
                          tile_n=tile_n, k_vd=k_vd),
        out_shape=jax.ShapeDtypeStruct((B, c_last, n_pad), jnp.float32),
        grid=(B, n_pad // tile_n),
        in_specs=in_specs,
        out_specs=pl.BlockSpec((1, c_last, tile_n), lambda b, t: (b, 0, t)),
        compiler_params=pltpu.CompilerParams(
            dimension_semantics=("parallel", "parallel"),
            vmem_limit_bytes=_VMEM_LIMIT_BYTES),
    )(*flat)


# ---------------------------------------------------------------------------
# Full FPModule forward.  Only layout plumbing (transpose / pad / final slice)
# happens outside the kernels.
# ---------------------------------------------------------------------------
def fp_module_forward(params, unknown, known, unknow_feats, known_feats, vdfeatures,
                      *, tile_n=512):
    B, n, _ = unknown.shape
    m = known.shape[1]
    k_vd = vdfeatures.shape[2]
    assert n % k_vd == 0, "FPModule requires n to be a multiple of vdfeatures' point count"

    # channels-first coordinates: lane axis = point count
    ux = jnp.transpose(unknown, (0, 2, 1))            # (B, 3, n)
    kx = jnp.transpose(known, (0, 2, 1))              # (B, 3, m)

    # lane-align the point axes and pick the n tile (multiple of 128 and of k_vd)
    tn = min(tile_n, _round_up(n, _LANE))
    tn = _round_up(tn, _LANE)
    if tn % k_vd != 0:
        tn = _round_up(tn, (_LANE * k_vd) // math.gcd(_LANE, k_vd))
    n_pad = _round_up(n, tn)
    m_pad = _round_up(m, _LANE)

    ux = _pad_last(ux, n_pad)
    uf = _pad_last(unknow_feats, n_pad)
    kx = _pad_last(kx, m_pad)
    kf = _pad_last(known_feats, m_pad)

    # 1) LabModule channel gate (masked max over the real n points + SE bottleneck + sigmoid)
    gate = _gate_pallas(uf, params["lab_w1"], params["lab_w2"], n_valid=n, tile_n=tn)

    # 2) fused three_nn / interpolate + gating + concat + vd tiling + shared MLP head
    out = _fp_fused_pallas(ux, kx, kf, uf, gate, vdfeatures, params,
                           m_valid=m, tile_n=tn, k_vd=k_vd)
    return out[:, :, :n]


# ---------------------------------------------------------------------------
# Deterministic parameter construction (mirrors the module's __init__ shapes).
# ---------------------------------------------------------------------------
def init_params(key, mlp_spec, c1, c2, cv):
    num_layers = len(mlp_spec) - 1
    keys = jax.random.split(key, 2 + 3 * num_layers)
    cr = c1 // 4
    params = {
        "lab_w1": 0.1 * jax.random.normal(keys[0], (cr, c1), jnp.float32),
        "lab_w2": 0.1 * jax.random.normal(keys[1], (c1, cr), jnp.float32),
    }
    # TODO(synk): BatchNorm2d training-mode batch statistics not implemented;
    # eval-mode BN is folded into per-channel scale/bias.
    eps = 1e-5
    layers = []
    for i in range(num_layers):
        c_in, c_out = mlp_spec[i], mlp_spec[i + 1]
        kw, kg, kb = keys[2 + 3 * i], keys[3 + 3 * i], keys[4 + 3 * i]
        w = 0.1 * jax.random.normal(kw, (c_out, c_in), jnp.float32)
        gamma = 1.0 + 0.05 * jax.random.normal(kg, (c_out, 1), jnp.float32)
        beta = 0.05 * jax.random.normal(kb, (c_out, 1), jnp.float32)
        running_mean = jnp.zeros((c_out, 1), jnp.float32)
        running_var = jnp.ones((c_out, 1), jnp.float32)
        scale = gamma / jnp.sqrt(running_var + eps)
        bias = beta - running_mean * scale
        layers.append((w, scale, bias))

    # split the first-layer weight along the concat order [interpolated(C2) | gated(C1) | vd(Cv)]
    w0, s0, b0 = layers[0]
    assert w0.shape[1] == c2 + c1 + cv
    params["mlp0"] = (w0[:, :c2].astype(_MM_DTYPE),
                      w0[:, c2:c2 + c1].astype(_MM_DTYPE),
                      w0[:, c2 + c1:].astype(_MM_DTYPE),
                      s0, b0)
    params["mlp_rest"] = [(w.astype(_MM_DTYPE), s, b) for (w, s, b) in layers[1:]]
    return params


if __name__ == "__main__":
    key = jax.random.PRNGKey(0)

    # small demo shapes; n and m deliberately not multiples of 128 to exercise the
    # lane-padding / masking path.
    B, n, m = 2, 120, 72
    C1, C2, Cv, k_vd = 16, 16, 8, 8

    # FPModule.__init__: mlp[0] += vdchannels
    mlp_spec = [C2 + C1, 32, 16]
    mlp_spec[0] += Cv                         # -> [40, 32, 16]

    kp, k1, k2, k3, k4, k5 = jax.random.split(key, 6)
    params = init_params(kp, mlp_spec, C1, C2, Cv)

    unknown = jax.random.normal(k1, (B, n, 3), jnp.float32)
    known = jax.random.normal(k2, (B, m, 3), jnp.float32)
    unknow_feats = jax.random.normal(k3, (B, C1, n), jnp.float32)
    known_feats = jax.random.normal(k4, (B, C2, m), jnp.float32)
    vdfeatures = jax.random.normal(k5, (B, Cv, k_vd), jnp.float32)

    out = fp_module_forward(params, unknown, known, unknow_feats, known_feats, vdfeatures)
    out = jax.block_until_ready(out)
    assert out.shape == (B, mlp_spec[-1], n), out.shape
    assert bool(jnp.all(jnp.isfinite(out)))
    print("KERNEL_OK")
</pallas_src>

<mosaic_0001>
module attributes {stable_mosaic.version = 11 : i64} {
  func.func @_gate_kernel(%arg0: i32, %arg1: i32, %arg2: memref<1x16x128xf32, #tpu.memory_space<vmem>>, %arg3: memref<4x16xf32, #tpu.memory_space<vmem>>, %arg4: memref<16x4xf32, #tpu.memory_space<vmem>>, %arg5: memref<1x16x1xf32, #tpu.memory_space<vmem>>, %arg6: memref<16x1xf32, #tpu.memory_space<vmem>>) attributes {dimension_semantics = [#tpu.dimension_semantics<parallel>, #tpu.dimension_semantics<arbitrary>], iteration_bounds = array<i64: 2, 1>, scalar_prefetch = 0 : i64, scratch_operands = 1 : i64, tpu.core_type = #tpu.core_type<tc>, window_params = [{transform_indices = @transform_0, window_bounds = array<i64: 1, 16, 128>}, {pipeline_mode = #tpu.pipeline_mode<synchronous>, transform_indices = @transform_1, window_bounds = array<i64: 4, 16>}, {pipeline_mode = #tpu.pipeline_mode<synchronous>, transform_indices = @transform_2, window_bounds = array<i64: 16, 4>}, {transform_indices = @transform_3, window_bounds = array<i64: 1, 16, 1>}]} {
    %c0_i32 = arith.constant 0 : i32
    %0 = arith.cmpi eq, %arg1, %c0_i32 : i32
    %1 = arith.extui %0 : i1 to i32
    %cst = arith.constant -1.000000e+30 : f32
    %c0_i32_0 = arith.constant 0 : i32
    %2 = arith.cmpi ne, %1, %c0_i32_0 : i32
    scf.if %2 {
      %21 = vector.broadcast %cst : f32 to vector<16x1xf32>
      %c0_11 = arith.constant 0 : index
      %c0_12 = arith.constant 0 : index
      %22 = vector.load %arg6[%c0_11, %c0_12] : memref<16x1xf32, #tpu.memory_space<vmem>>, vector<16x1xf32>
      tpu.vector_store %arg6[%c0_11, %c0_12], %21 {strides = array<i32>} : memref<16x1xf32, #tpu.memory_space<vmem>>, vector<16x1xf32>,
    } else {
    }
    %c0 = arith.constant 0 : index
    %c0_1 = arith.constant 0 : index
    %c0_2 = arith.constant 0 : index
    %3 = vector.load %arg2[%c0, %c0_1, %c0_2] : memref<1x16x128xf32, #tpu.memory_space<vmem>>, vector<1x16x128xf32>
    %4 = vector.shape_cast %3 : vector<1x16x128xf32> to vector<16x128xf32>
    %c128_i32 = arith.constant 128 : i32
    %5 = arith.muli %arg1, %c128_i32 : i32
    %6 = tpu.iota {dimensions = array<i32: 1>} : vector<16x128xi32>
    %7 = vector.broadcast %5 : i32 to vector<16x128xi32>
    %8 = arith.addi %7, %6 : vector<16x128xi32>
    %c120_i32 = arith.constant 120 : i32
    %9 = vector.broadcast %c120_i32 : i32 to vector<16x128xi32>
    %10 = arith.cmpi slt, %8, %9 : vector<16x128xi32>
    %cst_3 = arith.constant -1.000000e+30 : f32
    %11 = vector.broadcast %cst_3 : f32 to vector<16x128xf32>
    %12 = arith.select %10, %4, %11 : vector<16x128xi1>, vector<16x128xf32>
    %c0_4 = arith.constant 0 : index
    %c0_5 = arith.constant 0 : index
    %13 = vector.load %arg6[%c0_4, %c0_5] : memref<16x1xf32, #tpu.memory_space<vmem>>, vector<16x1xf32>
    %cst_6 = arith.constant dense<0xFF800000> : vector<16xf32>
    %14 = vector.multi_reduction <maximumf>, %12, %cst_6 [1] : vector<16x128xf32> to vector<16xf32>
    %15 = vector.shape_cast %14 : vector<16xf32> to vector<16x1xf32>
    %16 = arith.maximumf %13, %15 : vector<16x1xf32>
    %c0_7 = arith.constant 0 : index
    %c0_8 = arith.constant 0 : index
    %17 = vector.load %arg6[%c0_7, %c0_8] : memref<16x1xf32, #tpu.memory_space<vmem>>, vector<16x1xf32>
    tpu.vector_store %arg6[%c0_7, %c0_8], %16 {strides = array<i32>} : memref<16x1xf32, #tpu.memory_space<vmem>>, vector<16x1xf32>,
    %c0_i32_9 = arith.constant 0 : i32
    %18 = arith.cmpi eq, %arg1, %c0_i32_9 : i32
    %19 = arith.extui %18 : i1 to i32
    %c0_i32_10 = arith.constant 0 : i32
    %20 = arith.cmpi ne, %19, %c0_i32_10 : i32
    scf.if %20 {
      %c0_11 = arith.constant 0 : index
      %c0_12 = arith.constant 0 : index
      %21 = vector.load %arg6[%c0_11, %c0_12] : memref<16x1xf32, #tpu.memory_space<vmem>>, vector<16x1xf32>
      %c0_13 = arith.constant 0 : index
      %c0_14 = arith.constant 0 : index
      %22 = vector.load %arg3[%c0_13, %c0_14] : memref<4x16xf32, #tpu.memory_space<vmem>>, vector<4x16xf32>
      %cst_15 = arith.constant dense<0.000000e+00> : vector<4x1xf32>
      %23 = tpu.matmul %22, %21, %cst_15 {dimension_numbers = #tpu.dot_dimension_numbers<[1], [0], [0], [1], [0, 0, 1, 1], [], []>} : vector<4x16xf32>, vector<16x1xf32>, vector<4x1xf32> -> vector<4x1xf32>
      %cst_16 = arith.constant 0.000000e+00 : f32
      %24 = vector.broadcast %cst_16 : f32 to vector<4x1xf32>
      %25 = arith.maximumf %23, %24 : vector<4x1xf32>
      %c0_17 = arith.constant 0 : index
      %c0_18 = arith.constant 0 : index
      %26 = vector.load %arg4[%c0_17, %c0_18] : memref<16x4xf32, #tpu.memory_space<vmem>>, vector<16x4xf32>
      %cst_19 = arith.constant dense<0.000000e+00> : vector<16x1xf32>
      %27 = tpu.matmul %26, %25, %cst_19 {dimension_numbers = #tpu.dot_dimension_numbers<[1], [0], [0], [1], [0, 0, 1, 1], [], []>} : vector<16x4xf32>, vector<4x1xf32>, vector<16x1xf32> -> vector<16x1xf32>
      %cst_20 = arith.constant 0.000000e+00 : f32
      %28 = vector.broadcast %cst_20 : f32 to vector<16x1xf32>
      %29 = arith.subf %28, %27 : vector<16x1xf32>
      %30 = math.exp %29 : vector<16x1xf32>
      %cst_21 = arith.constant 1.000000e+00 : f32
      %31 = vector.broadcast %cst_21 : f32 to vector<16x1xf32>
      %32 = arith.addf %31, %30 : vector<16x1xf32>
      %cst_22 = arith.constant 1.000000e+00 : f32
      %33 = vector.broadcast %cst_22 : f32 to vector<16x1xf32>
      %34 = arith.divf %33, %32 : vector<16x1xf32>
      %c0_23 = arith.constant 0 : index
      %c0_24 = arith.constant 0 : index
      %c0_25 = arith.constant 0 : index
      %35 = vector.load %arg5[%c0_23, %c0_24, %c0_25] : memref<1x16x1xf32, #tpu.memory_space<vmem>>, vector<1x16x1xf32>
      %36 = vector.shape_cast %35 : vector<1x16x1xf32> to vector<16x1xf32>
      %37 = vector.shape_cast %34 : vector<16x1xf32> to vector<1x16x1xf32>
      tpu.vector_store %arg5[%c0_23, %c0_24, %c0_25], %37 {strides = array<i32>} : memref<1x16x1xf32, #tpu.memory_space<vmem>>, vector<1x16x1xf32>,
    } else {
    }
    return
  }
  func.func @transform_0(%arg0: i32, %arg1: i32) -> (i32, i32, i32) {
    %c0_i32 = arith.constant 0 : i32
    %c0_i32_0 = arith.constant 0 : i32
    return %arg0, %c0_i32, %arg1 : i32, i32, i32
  }
  func.func @transform_1(%arg0: i32, %arg1: i32) -> (i32, i32) {
    %c0_i32 = arith.constant 0 : i32
    %c0_i32_0 = arith.constant 0 : i32
    %c0_i32_1 = arith.constant 0 : i32
    return %c0_i32, %c0_i32_0 : i32, i32
  }
  func.func @transform_2(%arg0: i32, %arg1: i32) -> (i32, i32) {
    %c0_i32 = arith.constant 0 : i32
    %c0_i32_0 = arith.constant 0 : i32
    %c0_i32_1 = arith.constant 0 : i32
    return %c0_i32, %c0_i32_0 : i32, i32
  }
  func.func @transform_3(%arg0: i32, %arg1: i32) -> (i32, i32, i32) {
    %c0_i32 = arith.constant 0 : i32
    %c0_i32_0 = arith.constant 0 : i32
    %c0_i32_1 = arith.constant 0 : i32
    return %arg0, %c0_i32, %c0_i32_0 : i32, i32, i32
  }
}

</mosaic_0001>

<llo_original>
// kernel: tpu_custom_call.1
$region0: #{tpu_custom_call.1}
  #allocation0 [shape = 'u32[]', space=smem, size = 0x4, offset = 0x4, fixed_abs, tag = 'smem constant byte address 0x4 - core index']
  #allocation1 [shape = 'u32[72,128]{1,0:T(1,128)}', space=vmem, size = 0x9000, scoped, tag = 'internal scratch']
  #allocation2 [shape = 'f32[16,1]{1,0:T(8,128)}', space=vmem, size = 0x2000, scoped, tag = 'scratch operand']
  %s0 = inlined_call_operand.hbm [shape: f32[2,16,128], index: 0, kind: input, shape index: {}]
  %s1 = inlined_call_operand.vmem [shape: f32[4,16], index: 1, kind: input, shape index: {}]
  %s2 = inlined_call_operand.vmem [shape: f32[16,4], index: 2, kind: input, shape index: {}]
  %s3 = inlined_call_operand.vmem [shape: f32[2,16,1], index: 3, kind: output, shape index: {}]
  %s4 = sld [smem:[#allocation0]]
  $region57: #{tpu_custom_call.1} parent=0
    _
  %s6 = ssub.s32 1, %s4
  %s7 = scalar_select 0, %s6, %s4
  $region1: #{tpu_custom_call.1} parent=0
    #allocation3 [shape = 'u8[16384]{0}', space=vmem, size = 0x4000, scoped, tag = 'input window, operand 0']
    #allocation4 [shape = 's32[2]{0}', space=sflag, size = 0x8, scoped, tag = 'scoped memory for tpu_custom_call.1']
    %8 = vsyncpa [#allocation4], 0
    %s9 = scalar_lea.sflag [#allocation4], 1
    %10 = vsyncpa %s9, 0
    loop: start=0, step=1, limit=4
    $region2: #{tpu_custom_call.1} parent=1 // loop_pre_header
      _
    $region3: #{tpu_custom_call.1} parent=1 // loop_header
      %s12 = sphi 0, %s16
      %p13 = scmp.ge.s32.totalorder %s12, 4
      %s19 = sphi 0, %s31
      %s20 = sphi 0, %s27
      %s21 = sphi 0, %s19
      %s22 = sphi 0, %s20
      %s23 = sphi 0, %s21
      %s24 = sphi 0, %s22
      %s36 = sphi 0, %s38
      %s39 = sphi 0, %s36
      %s40 = sphi 0, %s39
      %s56 = sphi 0, %s40
      %s60 = sphi 0, %s60
      %s62 = sphi 0, %s60
      %s63 = sphi 0, %s62
      %s77 = sphi 0, %s63
      %s81 = sphi 0, %s81
      %s83 = sphi 0, %s81
      %s84 = sphi 0, %s83
      %s98 = sphi 0, %s84
      %s104 = sphi 0, %s106
      %s107 = sphi 0, %s104
      %s108 = sphi 0, %s107
      %s124 = sphi 0, %s108
    $region4: #{tpu_custom_call.1} parent=1 // loop_header_branch
      %15 = sbr.rel (%p13) target = $region8
    $region5: #{tpu_custom_call.1} parent=1 // loop_body
      %s17 = ssub.s32 %s12, 1
      %s18 = ssub.s32 %s12, 2
      %s25 = sadd.s32 1, %s20
      %p26 = scmp.ge.s32.totalorder %s25, 1
      %s27 = scalar_select %p26, 0, %s25
      %s28 = sadd.s32 1, %s19
      %s29 = scalar_select %p26, %s28, %s19
      %p30 = scmp.ge.s32.totalorder %s29, 2
      %s31 = scalar_select %p30, 0, %s29
      %s32 = ssub.s32 %s19, %s31
      %s33 = ssub.s32 %s20, %s27
      %s34 = sor.u32 %s32, %s33
      %p35 = scmp.eq.s32.totalorder %s34, 0
      %s37 = sadd.s32 %s36, 1
      %s38 = scalar_select %p35, %s36, %s37
      %p41 = pneg %p35
      %p42 = scmp.eq.s32.totalorder %s12, 1
      %p43 = por %p41, %p42
      %p44 = scmp.ne.s32.totalorder %s36, %s39
      %p45 = scmp.eq.s32.totalorder %s12, 0
      %p46 = por %p44, %p45
      %p47 = scmp.ne.s32.totalorder %s36, %s39
      %p48 = scmp.eq.s32.totalorder %s17, 1
      %p49 = por %p47, %p48
      %p50 = scmp.ne.s32.totalorder %s39, %s40
      %p51 = scmp.eq.s32.totalorder %s17, 0
      %p52 = por %p50, %p51
      %p53 = scmp.ne.s32.totalorder %s39, %s40
      %p54 = scmp.eq.s32.totalorder %s18, 1
      %p55 = por %p53, %p54
      %p57 = scmp.ne.s32.totalorder %s40, %s56
      %p58 = scmp.eq.s32.totalorder %s18, 0
      %p59 = por %p57, %p58
      %s61 = sadd.s32 %s60, 1
      %p64 = scmp.eq.s32.totalorder %s12, 1
      %p65 = scmp.ne.s32.totalorder %s60, %s62
      %p66 = scmp.eq.s32.totalorder %s12, 0
      %p67 = por %p65, %p66
      %p68 = scmp.ne.s32.totalorder %s60, %s62
      %p69 = scmp.eq.s32.totalorder %s17, 1
      %p70 = por %p68, %p69
      %p71 = scmp.ne.s32.totalorder %s62, %s63
      %p72 = scmp.eq.s32.totalorder %s17, 0
      %p73 = por %p71, %p72
      %p74 = scmp.ne.s32.totalorder %s62, %s63
      %p75 = scmp.eq.s32.totalorder %s18, 1
      %p76 = por %p74, %p75
      %p78 = scmp.ne.s32.totalorder %s63, %s77
      %p79 = scmp.eq.s32.totalorder %s18, 0
      %p80 = por %p78, %p79
      %s82 = sadd.s32 %s81, 1
      %p85 = scmp.eq.s32.totalorder %s12, 1
      %p86 = scmp.ne.s32.totalorder %s81, %s83
      %p87 = scmp.eq.s32.totalorder %s12, 0
      %p88 = por %p86, %p87
      %p89 = scmp.ne.s32.totalorder %s81, %s83
      %p90 = scmp.eq.s32.totalorder %s17, 1
      %p91 = por %p89, %p90
      %p92 = scmp.ne.s32.totalorder %s83, %s84
      %p93 = scmp.eq.s32.totalorder %s17, 0
      %p94 = por %p92, %p93
      %p95 = scmp.ne.s32.totalorder %s83, %s84
      %p96 = scmp.eq.s32.totalorder %s18, 1
      %p97 = por %p95, %p96
      %p99 = scmp.ne.s32.totalorder %s84, %s98
      %p100 = scmp.eq.s32.totalorder %s18, 0
      %p101 = por %p99, %p100
      %s102 = ssub.s32 %s19, %s31
      %p103 = scmp.eq.s32.totalorder %s102, 0
      %s105 = sadd.s32 %s104, 1
      %s106 = scalar_select %p103, %s104, %s105
      %p109 = pneg %p103
      %p110 = scmp.eq.s32.totalorder %s12, 1
      %p111 = por %p109, %p110
      %p112 = scmp.ne.s32.totalorder %s104, %s107
      %p113 = scmp.eq.s32.totalorder %s12, 0
      %p114 = por %p112, %p113
      %p115 = scmp.ne.s32.totalorder %s104, %s107
      %p116 = scmp.eq.s32.totalorder %s17, 1
      %p117 = por %p115, %p116
      %p118 = scmp.ne.s32.totalorder %s107, %s108
      %p119 = scmp.eq.s32.totalorder %s17, 0
      %p120 = por %p118, %p119
      %p121 = scmp.ne.s32.totalorder %s107, %s108
      %p122 = scmp.eq.s32.totalorder %s18, 1
      %p123 = por %p121, %p122
      %p125 = scmp.ne.s32.totalorder %s108, %s124
      %p126 = scmp.eq.s32.totalorder %s18, 0
      %p127 = por %p125, %p126
      %p128 = scmp.le.s32.totalorder 1, %s12
      %p129 = scmp.lt.s32.totalorder %s12, 3
      %p130 = pnand %p128, %p129
      %p131 = pneg %p130
      // Predicated region
      $region9: #{tpu_custom_call.1} parent=5 // pred_check
        _
      $region10: #{tpu_custom_call.1} parent=5 // pred_check_branch
        %133 = sbr.rel (%p130) target = $region12
      $region11: #{tpu_custom_call.1} parent=5 // pred_region
        %s134 = ssub.s32 %s12, 1
        // Predicated region
        $region13: #{tpu_custom_call.1} parent=11 // pred_check
          %p135 = pneg %p73
        $region14: #{tpu_custom_call.1} parent=11 // pred_check_branch
          %137 = sbr.rel (%p135) target = $region16
        $region15: #{tpu_custom_call.1} parent=11 // pred_region
          _
        $region16: #{tpu_custom_call.1} parent=11 // pred_fallthru
          _
        // Predicated region
        $region17: #{tpu_custom_call.1} parent=11 // pred_check
          %p138 = pneg %p94
        $region18: #{tpu_custom_call.1} parent=11 // pred_check_branch
          %140 = sbr.rel (%p138) target = $region20
        $region19: #{tpu_custom_call.1} parent=11 // pred_region
          _
        $region20: #{tpu_custom_call.1} parent=11 // pred_fallthru
          _
      $region12: #{tpu_custom_call.1} parent=5 // pred_fallthru
        _
      %p141 = scmp.lt.s32.totalorder %s12, 2
      // Predicated region
      $region21: #{tpu_custom_call.1} parent=5 // pred_check
        %p142 = pneg %p141
      $region22: #{tpu_custom_call.1} parent=5 // pred_check_branch
        %144 = sbr.rel (%p142) target = $region24
      $region23: #{tpu_custom_call.1} parent=5 // pred_region
        // Predicated region
        $region25: #{tpu_custom_call.1} parent=23 // pred_check
          %p145 = pneg %p46
        $region26: #{tpu_custom_call.1} parent=23 // pred_check_branch
          %147 = sbr.rel (%p145) target = $region28
        $region27: #{tpu_custom_call.1} parent=23 // pred_region
          %s148 = sand.u32 %s36, 1
          %s149 = scalar_lea.sflag [#allocation4], %s148
          %s150 = sand.u32 %s36, 1
          %s151 = smul.addr %s150, 16
          %s152 = scalar_lea.vmem [#allocation3], %s151
          %154 = vsyncadd %s149, 0
          %s155 = smul.addr %s19, 2
          %s156 = sadd.s32 %s20, %s155
          %s157 = smul.addr %s156, 8
          %s158 = scalar_lea.hbm %s0, %s157
          %s159 = sshll.u32 %s158, 4
          %s160 = int_to_ptr.hbm [resolvable:$true] %s159
          %s161 = sshll.u32 %s152, 4
          %s162 = int_to_ptr.vmem [resolvable:$true] %s161
          %167 = dma.hbm_to_vmem [thread:$0]  %s160, 256, %s162, %s149, 128, 128, 8
        $region28: #{tpu_custom_call.1} parent=23 // pred_fallthru
          _
      $region24: #{tpu_custom_call.1} parent=5 // pred_fallthru
        _
      %p168 = scmp.le.s32.totalorder 1, %s12
      %p169 = scmp.lt.s32.totalorder %s12, 3
      %p170 = pnand %p168, %p169
      %p171 = pneg %p170
      // Predicated region
      $region29: #{tpu_custom_call.1} parent=5 // pred_check
        _
      $region30: #{tpu_custom_call.1} parent=5 // pred_check_branch
        %173 = sbr.rel (%p170) target = $region32
      $region31: #{tpu_custom_call.1} parent=5 // pred_region
        %s174 = ssub.s32 %s12, 1
        %s175 = sand.u32 %s39, 1
        %s176 = scalar_lea.sflag [#allocation4], %s175
        %s177 = sand.u32 %s39, 1
        %s178 = smul.addr %s177, 16
        %s179 = scalar_lea.vmem [#allocation3], %s178
        // Predicated region
        $region33: #{tpu_custom_call.1} parent=31 // pred_check
          %p180 = pneg %p52
        $region34: #{tpu_custom_call.1} parent=31 // pred_check_branch
          %182 = sbr.rel (%p180) target = $region36
        $region35: #{tpu_custom_call.1} parent=31 // pred_region
          %184 = dma.done %s176, 256
        $region36: #{tpu_custom_call.1} parent=31 // pred_fallthru
          _
        %s185 = sand.u32 %s39, 1
        %s186 = scalar_lea.sflag [#allocation4], %s185
        %s187 = sand.u32 %s39, 1
        %s188 = smul.addr %s187, 16
        %s189 = scalar_lea.vmem [#allocation3], %s188
        %p190 = pneg %p52
        %p191 = pneg %p49
        %p192 = pneg %p73
        %p193 = pneg %p70
        %p194 = pneg %p94
        %p195 = pneg %p91
        %p196 = pneg %p120
        %p197 = pneg %p117
        %p198 = scmp.lt.s32.totalorder %s21, 1
        %s199 = scalar_select %p198, %s21, 1
        %s200 = smul.addr %s199, 2
        %s201 = smul.addr %s200, 8
        %s202 = scalar_lea.vmem %s3, %s201
        %p203 = scmp.lt.s32.totalorder %s21, 1
        %s204 = scalar_select %p203, %s21, 1
        %s205 = smul.addr %s204, 2
        %s206 = smul.addr %s205, 8
        %s207 = scalar_lea.vmem %s3, %s206
        %p208 = scmp.eq.s32.totalorder %s22, 0
        // Predicated region
        $region37: #{tpu_custom_call.1} parent=31 // pred_check
          %p209 = pneg %p208
        $region38: #{tpu_custom_call.1} parent=31 // pred_check_branch
          %211 = sbr.rel (%p209) target = $region40
        $region39: #{tpu_custom_call.1} parent=31 // pred_region
          %vm212 = vcmask 7168
          %213 = vst.msk [vmem:[#allocation2] sm:$0xff] %vm212, -1e+30
          %214 = vst.msk [vmem:[#allocation2 + $0x8] sm:$0xff] %vm212, -1e+30
        $region40: #{tpu_custom_call.1} parent=31 // pred_fallthru
          _
        %v215 = vld [vmem:[%s179] sm:$0xff]
        %v216 = vld [vmem:[%s179 + $0x8] sm:$0xff]
        %s217 = smul.u32 %s22, 128
        %v218 = vlaneseq
        %v219 = vand.u32 %v218, 127
        %v220 = vstv %s217
        %v221 = vadd.s32 %v220, %v219
        %vm222 = vcmp.lt.s32.totalorder %v221, 120
        %v223 = vsel %vm222, %v215, -1e+30
        %v224 = vsel %vm222, %v216, -1e+30
        %v225 = vld [vmem:[#allocation2] sm:$0xff]
        %v226 = vld [vmem:[#allocation2 + $0x8] sm:$0xff]
        %227 = vmax.xlane.f32.xlu0 %v223
        %v228 = vpop.xlane.xlu0 %227
        %229 = vmax.xlane.f32.xlu0 %v224
        %v230 = vpop.xlane.xlu0 %229
        %v231 = vmax.f32 %v225, %v228
        %v232 = vmax.f32 %v226, %v230
        %vm233 = vcmask 7168
        %234 = vst.msk [vmem:[#allocation2] sm:$0xff] %vm233, %v231
        %235 = vst.msk [vmem:[#allocation2 + $0x8] sm:$0xff] %vm233, %v232
        // Predicated region
        $region41: #{tpu_custom_call.1} parent=31 // pred_check
          %p236 = pneg %p208
        $region42: #{tpu_custom_call.1} parent=31 // pred_check_branch
          %238 = sbr.rel (%p236) target = $region44
        $region43: #{tpu_custom_call.1} parent=31 // pred_region
          %v239 = vld [vmem:[#allocation2] sm:$0xff]
          %v240 = vld [vmem:[#allocation2 + $0x8] sm:$0xff]
          %v241 = vld [vmem:[%s1] sm:$0xf]
          %vm242 = vcmask 130048
          %v244 = vsel %vm242, %v241, 0
          %246 = vmatpush.msra.mxu0 0.0
          %247 = vmatpush.msra.mxu0 0.0
          %248 = vmatpush.msra.mxu0 0.0
          %249 = vmatpush.msra.mxu0 0.0
          %250 = vmatpush.msra.mxu0 0.0
          %251 = vmatpush.msra.mxu0 0.0
          %252 = vmatpush.msra.mxu0 0.0
          %253 = vmatpush.msra.mxu0 0.0
          %254 = vmatpush.msra.mxu0 0.0
          %255 = vmatpush.msra.mxu0 0.0
          %256 = vmatpush.msra.mxu0 0.0
          %257 = vmatpush.msra.mxu0 0.0
          %258 = vmatpush.msra.mxu0 0.0
          %259 = vmatpush.msra.mxu0 0.0
          %260 = vmatpush.msra.mxu0 %v240
          %261 = vmatpush.msra.mxu0 %v239
          %262 = vmatmul.f32.gmra.mxu0 %v244
          %v263 = vpop.f32.mrf.mxu0
          %v264 = vadd.f32 0.0, %v263
          %265 = vdwg.mxu0
          %v266 = vmax.f32 %v264, 0.0
          %v267 = vld [vmem:[%s2] sm:$0xff]
          %v268 = vld [vmem:[%s2 + $0x8] sm:$0xff]
          %vm269 = vcmask 31744
          %v271 = vsel %vm269, %v267, 0
          %v274 = vsel %vm269, %v268, 0
          %vm276 = vcmask 1043456
          %v278 = vsel %vm276, %v266, 0
          %280 = vmatpush.msra.mxu0 0.0
          %281 = vmatpush.msra.mxu0 0.0
          %282 = vmatpush.msra.mxu0 0.0
          %283 = vmatpush.msra.mxu0 0.0
          %284 = vmatpush.msra.mxu0 0.0
          %285 = vmatpush.msra.mxu0 0.0
          %286 = vmatpush.msra.mxu0 0.0
          %287 = vmatpush.msra.mxu0 0.0
          %288 = vmatpush.msra.mxu0 0.0
          %289 = vmatpush.msra.mxu0 0.0
          %290 = vmatpush.msra.mxu0 0.0
          %291 = vmatpush.msra.mxu0 0.0
          %292 = vmatpush.msra.mxu0 0.0
          %293 = vmatpush.msra.mxu0 0.0
          %294 = vmatpush.msra.mxu0 0.0
          %295 = vmatpush.msra.mxu0 %v278
          %296 = vmatmul.f32.gmra.mxu0 %v271
          %v297 = vpop.f32.mrf.mxu0
          %v298 = vadd.f32 0.0, %v297
          %299 = vmatmul.f32.gmra.mxu0 %v274
          %v300 = vpop.f32.mrf.mxu0
          %v301 = vadd.f32 0.0, %v300
          %302 = vdwg.mxu0
          %v303 = vsub.f32 0.0, %v298
          %v304 = vsub.f32 0.0, %v301
          %v305 = vmul.f32 %v303, 1.442695
          %v306 = vpow.pop %v305
          %v307 = vmul.f32 %v304, 1.442695
          %v308 = vpow.pop %v307
          %v309 = vadd.f32 %v306, 1.0
          %v310 = vadd.f32 %v308, 1.0
          %v311 = vrcp.pop %v309
          %v312 = vmul.f32 %v309, %v311
          %v313 = vsub.f32 1.0, %v312
          %v314 = vmul.f32 %v311, %v313
          %v315 = vadd.f32 %v311, %v314
          %vm316 = vweird.f32 %v309
          %vm317 = vweird.f32 %v311
          %vm318 = vmor %vm316, %vm317
          %v319 = vsel %vm318, %v311, %v315
          %v320 = vand.u32 2147483647, %v309
          %vm321 = vcmp.eq.f32.partialorder %v320, 8.507059e+37
          %v322 = vand.u32 %v309, 2147483648
          %v323 = vor.u32 1.1754944e-38, %v322
          %v324 = vsel %vm321, %v323, %v319
          %v325 = vmul.f32 1.0, %v324
          %v326 = vrcp.pop %v310
          %v327 = vmul.f32 %v310, %v326
          %v328 = vsub.f32 1.0, %v327
          %v329 = vmul.f32 %v326, %v328
          %v330 = vadd.f32 %v326, %v329
          %vm331 = vweird.f32 %v310
          %vm332 = vweird.f32 %v326
          %vm333 = vmor %vm331, %vm332
          %v334 = vsel %vm333, %v326, %v330
          %v335 = vand.u32 2147483647, %v310
          %vm336 = vcmp.eq.f32.partialorder %v335, 8.507059e+37
          %v337 = vand.u32 %v310, 2147483648
          %v338 = vor.u32 1.1754944e-38, %v337
          %v339 = vsel %vm336, %v338, %v334
          %v340 = vmul.f32 1.0, %v339
          %341 = vst.msk [vmem:[%s207] sm:$0xff] %vm233, %v325
          %342 = vst.msk [vmem:[%s207 + $0x8] sm:$0xff] %vm233, %v340
        $region44: #{tpu_custom_call.1} parent=31 // pred_fallthru
          _
        %p343 = scmp.lt.s32.totalorder %s21, 1
        %s344 = scalar_select %p343, %s21, 1
        %s345 = smul.addr %s344, 2
        %s346 = smul.addr %s345, 8
        %s347 = scalar_lea.vmem %s3, %s346
        // Predicated region
        $region45: #{tpu_custom_call.1} parent=31 // pred_check
          %p348 = pneg %p117
        $region46: #{tpu_custom_call.1} parent=31 // pred_check_branch
          %350 = sbr.rel (%p348) target = $region48
        $region47: #{tpu_custom_call.1} parent=31 // pred_region
          _
        $region48: #{tpu_custom_call.1} parent=31 // pred_fallthru
          _
      $region32: #{tpu_custom_call.1} parent=5 // pred_fallthru
        _
      %p351 = scmp.le.s32.totalorder 2, %s12
      // Predicated region
      $region49: #{tpu_custom_call.1} parent=5 // pred_check
        %p352 = pneg %p351
      $region50: #{tpu_custom_call.1} parent=5 // pred_check_branch
        %354 = sbr.rel (%p352) target = $region52
      $region51: #{tpu_custom_call.1} parent=5 // pred_region
        %s355 = ssub.s32 %s12, 2
        // Predicated region
        $region53: #{tpu_custom_call.1} parent=51 // pred_check
          %p356 = pneg %p123
        $region54: #{tpu_custom_call.1} parent=51 // pred_check_branch
          %358 = sbr.rel (%p356) target = $region56
        $region55: #{tpu_custom_call.1} parent=51 // pred_region
          %p359 = scmp.lt.s32.totalorder %s23, 1
          %s360 = scalar_select %p359, %s23, 1
          %s361 = smul.addr %s360, 2
          %s362 = smul.addr %s361, 8
          %s363 = scalar_lea.vmem %s3, %s362
        $region56: #{tpu_custom_call.1} parent=51 // pred_fallthru
          _
      $region52: #{tpu_custom_call.1} parent=5 // pred_fallthru
        _
    $region6: #{tpu_custom_call.1} parent=1 // loop_footer
      %s16 = sadd.s32 1, %s12
    $region7: #{tpu_custom_call.1} parent=1 // loop_footer_branch
      %11 = sbr.rel target = $region3
    $region8: #{tpu_custom_call.1} parent=1 // loop_exit
      _
    %364 = vsyncpa [#allocation4], 1
    %s365 = scalar_lea.sflag [#allocation4], 1
    %366 = vsyncpa %s365, 1

</llo_original>
